<compile_context>
chip_gen: v5e
topology: v5e:2x2
jax: 0.10.0
libtpu: 0.0.40
codegen_flags: <defaults>
</compile_context>

<pallas_src>
import jax
import jax.numpy as jnp
import numpy as np
from jax.experimental import pallas as pl
from jax.experimental.pallas import tpu as pltpu


# ---------------------------------------------------------------------------
# Fused Pallas kernel: one batch element per grid step.
# ---------------------------------------------------------------------------
def _resblock_kernel(x_ref, w1_ref, b1_ref, w2_ref, b2_ref, o_ref,
                     xpad_ref, hpad_ref):
    """Fused ResBlock for one image in lane-dense (H, W*C) layout.

    x_ref:  (1, H, W*C)        input image (also the identity shortcut)
    w1_ref: (W*C, 3*W*C)       conv1 block-tridiagonal weight (BN1 scale folded)
    b1_ref: (1, W*C)           BN1 bias, tiled per spatial column
    w2_ref: (W*C, 3*W*C)       conv2 block weight (BN2 scale folded)
    b2_ref: (1, W*C)           BN2 bias, tiled per spatial column
    o_ref:  (1, H, W*C)        output
    xpad_ref, hpad_ref: (H+2, W*C) f32 VMEM scratch (row-padded operands)
    """
    h = o_ref.shape[1]
    wc = o_ref.shape[2]
    zero_row = jnp.zeros((1, wc), jnp.float32)

    # ---- conv1 + BN1 + ReLU -------------------------------------------------
    x_f32 = x_ref[0].astype(jnp.float32)                 # (H, W*C), kept for skip
    xpad_ref[pl.ds(0, 1), :] = zero_row                  # top halo row
    xpad_ref[pl.ds(h + 1, 1), :] = zero_row              # bottom halo row
    xpad_ref[pl.ds(1, h), :] = x_f32

    # One MXU matmul covers all 3 dx taps (K = W*Cin = 128, N = 3*W*Cout).
    r1 = jnp.dot(xpad_ref[...], w1_ref[...],
                 preferred_element_type=jnp.float32)      # (H+2, 3*W*C)
    hid = (r1[0:h, 0:wc]                                  # dy = -1 tap
           + r1[1:h + 1, wc:2 * wc]                       # dy =  0 tap
           + r1[2:h + 2, 2 * wc:3 * wc]                   # dy = +1 tap
           + b1_ref[...])
    hid = jnp.maximum(hid, 0.0)

    # ---- conv2 + BN2 + residual + ReLU -------------------------------------
    hpad_ref[pl.ds(0, 1), :] = zero_row
    hpad_ref[pl.ds(h + 1, 1), :] = zero_row
    hpad_ref[pl.ds(1, h), :] = hid

    r2 = jnp.dot(hpad_ref[...], w2_ref[...],
                 preferred_element_type=jnp.float32)      # (H+2, 3*W*C)
    out = (r2[0:h, 0:wc]
           + r2[1:h + 1, wc:2 * wc]
           + r2[2:h + 2, 2 * wc:3 * wc]
           + b2_ref[...])
    out = out + x_f32                                     # identity shortcut (f32)
    out = jnp.maximum(out, 0.0)
    o_ref[...] = out.reshape(1, h, wc).astype(o_ref.dtype)


# ---------------------------------------------------------------------------
# Glue: BN folding, block-tridiagonal weight construction, pallas_call wrapper.
# ---------------------------------------------------------------------------
def _fold_bn(gamma, beta, mean, var, eps=1e-5):
    scale = gamma / jnp.sqrt(var + eps)
    bias = beta - mean * scale
    return scale, bias


def _build_block_weight(w_hwio, scale, width):
    """(3,3,Cin,Cout) conv weight -> (W*Cin, 3*W*Cout) block weight.

    For each dy, the (W*Cin, W*Cout) block is block-tridiagonal:
      W_dy[x_in*Cin+ci, x_out*Cout+co] = w[dy, x_in-x_out+1, ci, co] * scale[co]
    so one matmul realizes all dx taps AND the left/right zero padding.
    """
    kh, kw, cin, cout = w_hwio.shape
    wf = w_hwio * scale                                   # fold BN scale
    blocks = []
    for dy in range(kh):
        wdy = jnp.zeros((width * cin, width * cout), wf.dtype)
        for dx in range(kw):
            shift = jnp.eye(width, k=1 - dx, dtype=wf.dtype)
            wdy = wdy + jnp.kron(shift, wf[dy, dx])
        blocks.append(wdy)
    return jnp.concatenate(blocks, axis=1)                # (W*Cin, 3*W*Cout)


def resblock_forward(x_nchw, params):
    """Full ResBlock forward, stride_num=1 (identity shortcut), eval-mode BN."""
    x = jnp.transpose(x_nchw, (0, 2, 3, 1))               # NCHW -> NHWC
    n, h, w, c = x.shape
    wc = w * c

    s1, b1 = _fold_bn(*params["bn1"])
    s2, b2 = _fold_bn(*params["bn2"])
    w1_blk = _build_block_weight(params["w1"], s1, w)
    w2_blk = _build_block_weight(params["w2"], s2, w)
    b1_lane = jnp.tile(b1, w).reshape(1, wc)
    b2_lane = jnp.tile(b2, w).reshape(1, wc)
    x_lane = x.reshape(n, h, wc)                          # lane-dense packing

    out_lane = pl.pallas_call(
        _resblock_kernel,
        out_shape=jax.ShapeDtypeStruct((n, h, wc), x.dtype),
        grid_spec=pltpu.PrefetchScalarGridSpec(
            num_scalar_prefetch=0,
            grid=(n,),
            in_specs=[
                pl.BlockSpec((1, h, wc), lambda i: (i, 0, 0)),
                pl.BlockSpec((wc, 3 * wc), lambda i: (0, 0)),
                pl.BlockSpec((1, wc), lambda i: (0, 0)),
                pl.BlockSpec((wc, 3 * wc), lambda i: (0, 0)),
                pl.BlockSpec((1, wc), lambda i: (0, 0)),
            ],
            out_specs=pl.BlockSpec((1, h, wc), lambda i: (i, 0, 0)),
            scratch_shapes=[
                pltpu.VMEM((h + 2, wc), jnp.float32),     # padded conv1 operand
                pltpu.VMEM((h + 2, wc), jnp.float32),     # padded conv2 operand
            ],
        ),
        compiler_params=pltpu.CompilerParams(
            dimension_semantics=("parallel",)),
    )(x_lane, w1_blk, b1_lane, w2_blk, b2_lane)

    out = out_lane.reshape(n, h, w, c)
    return jnp.transpose(out, (0, 3, 1, 2))               # NHWC -> NCHW


# ---------------------------------------------------------------------------
# Pure-JAX reference (silent correctness check)
# ---------------------------------------------------------------------------
def _ref_conv(x, w):
    return jax.lax.conv_general_dilated(
        x, w, window_strides=(1, 1), padding="SAME",
        dimension_numbers=("NHWC", "HWIO", "NHWC"))


def _ref_resblock(x_nchw, params):
    x = jnp.transpose(x_nchw, (0, 2, 3, 1))
    s1, b1 = _fold_bn(*params["bn1"])
    s2, b2 = _fold_bn(*params["bn2"])
    h = jnp.maximum(_ref_conv(x, params["w1"]) * s1 + b1, 0.0)
    out = _ref_conv(h, params["w2"]) * s2 + b2 + x
    out = jnp.maximum(out, 0.0)
    return jnp.transpose(out, (0, 3, 1, 2))


# ---------------------------------------------------------------------------
if __name__ == "__main__":
    # ResBlock(in_channels=8, out_channels=8, stride_num=1)
    # W*C = 16*8 = 128 -> exactly one lane-dense vreg row per image row.
    N, C, H, W = 2, 8, 16, 16
    key = jax.random.PRNGKey(0)
    ks = jax.random.split(key, 11)

    x = jax.random.normal(ks[0], (N, C, H, W), jnp.float32)   # NCHW like PyTorch

    params = {
        # conv weights stored HWIO (kh, kw, Cin, Cout)
        "w1": jax.random.normal(ks[1], (3, 3, C, C), jnp.float32) * 0.1,
        "w2": jax.random.normal(ks[2], (3, 3, C, C), jnp.float32) * 0.1,
        # BN params: (gamma, beta, running_mean, running_var), eval-mode BN
        "bn1": (1.0 + 0.1 * jax.random.normal(ks[3], (C,), jnp.float32),
                0.1 * jax.random.normal(ks[4], (C,), jnp.float32),
                0.1 * jax.random.normal(ks[5], (C,), jnp.float32),
                jax.random.uniform(ks[6], (C,), jnp.float32, 0.5, 1.5)),
        "bn2": (1.0 + 0.1 * jax.random.normal(ks[7], (C,), jnp.float32),
                0.1 * jax.random.normal(ks[8], (C,), jnp.float32),
                0.1 * jax.random.normal(ks[9], (C,), jnp.float32),
                jax.random.uniform(ks[10], (C,), jnp.float32, 0.5, 1.5)),
    }

    out = resblock_forward(x, params)
    jax.block_until_ready(out)

    ref = _ref_resblock(x, params)
    np.testing.assert_allclose(np.asarray(out), np.asarray(ref),
                               rtol=1e-4, atol=1e-4)

    print("KERNEL_OK")
</pallas_src>

<mosaic_0001>
module attributes {stable_mosaic.version = 11 : i64} {
  func.func @_resblock_kernel(%arg0: i32, %arg1: memref<1x16x128xf32, #tpu.memory_space<vmem>>, %arg2: memref<128x384xf32, #tpu.memory_space<vmem>>, %arg3: memref<1x128xf32, #tpu.memory_space<vmem>>, %arg4: memref<128x384xf32, #tpu.memory_space<vmem>>, %arg5: memref<1x128xf32, #tpu.memory_space<vmem>>, %arg6: memref<1x16x128xf32, #tpu.memory_space<vmem>>, %arg7: memref<18x128xf32, #tpu.memory_space<vmem>>, %arg8: memref<18x128xf32, #tpu.memory_space<vmem>>) attributes {dimension_semantics = [#tpu.dimension_semantics<parallel>], iteration_bounds = array<i64: 2>, scalar_prefetch = 0 : i64, scratch_operands = 2 : i64, tpu.core_type = #tpu.core_type<tc>, window_params = [{transform_indices = @transform_0, window_bounds = array<i64: 1, 16, 128>}, {pipeline_mode = #tpu.pipeline_mode<synchronous>, transform_indices = @transform_1, window_bounds = array<i64: 128, 384>}, {pipeline_mode = #tpu.pipeline_mode<synchronous>, transform_indices = @transform_2, window_bounds = array<i64: 1, 128>}, {pipeline_mode = #tpu.pipeline_mode<synchronous>, transform_indices = @transform_3, window_bounds = array<i64: 128, 384>}, {pipeline_mode = #tpu.pipeline_mode<synchronous>, transform_indices = @transform_4, window_bounds = array<i64: 1, 128>}, {transform_indices = @transform_5, window_bounds = array<i64: 1, 16, 128>}]} {
    %cst = arith.constant 0.000000e+00 : f32
    %0 = vector.broadcast %cst : f32 to vector<1x128xf32>
    %c0 = arith.constant 0 : index
    %c0_0 = arith.constant 0 : index
    %c0_1 = arith.constant 0 : index
    %1 = vector.load %arg1[%c0, %c0_0, %c0_1] : memref<1x16x128xf32, #tpu.memory_space<vmem>>, vector<1x16x128xf32>
    %2 = vector.shape_cast %1 : vector<1x16x128xf32> to vector<16x128xf32>
    %c0_2 = arith.constant 0 : index
    %c0_3 = arith.constant 0 : index
    %3 = vector.load %arg7[%c0_2, %c0_3] : memref<18x128xf32, #tpu.memory_space<vmem>>, vector<1x128xf32>
    tpu.vector_store %arg7[%c0_2, %c0_3], %0 {strides = array<i32>} : memref<18x128xf32, #tpu.memory_space<vmem>>, vector<1x128xf32>,
    %c17 = arith.constant 17 : index
    %c0_4 = arith.constant 0 : index
    %4 = vector.load %arg7[%c17, %c0_4] : memref<18x128xf32, #tpu.memory_space<vmem>>, vector<1x128xf32>
    tpu.vector_store %arg7[%c17, %c0_4], %0 {strides = array<i32>} : memref<18x128xf32, #tpu.memory_space<vmem>>, vector<1x128xf32>,
    %c1 = arith.constant 1 : index
    %c0_5 = arith.constant 0 : index
    %5 = vector.load %arg7[%c1, %c0_5] : memref<18x128xf32, #tpu.memory_space<vmem>>, vector<16x128xf32>
    tpu.vector_store %arg7[%c1, %c0_5], %2 {strides = array<i32>} : memref<18x128xf32, #tpu.memory_space<vmem>>, vector<16x128xf32>,
    %c0_6 = arith.constant 0 : index
    %c0_7 = arith.constant 0 : index
    %6 = vector.load %arg7[%c0_6, %c0_7] : memref<18x128xf32, #tpu.memory_space<vmem>>, vector<18x128xf32>
    %c0_8 = arith.constant 0 : index
    %c0_9 = arith.constant 0 : index
    %7 = vector.load %arg2[%c0_8, %c0_9] : memref<128x384xf32, #tpu.memory_space<vmem>>, vector<128x384xf32>
    %cst_10 = arith.constant dense<0.000000e+00> : vector<18x384xf32>
    %8 = tpu.matmul %6, %7, %cst_10 {dimension_numbers = #tpu.dot_dimension_numbers<[1], [0], [0], [1], [0, 0, 1, 1], [], []>} : vector<18x128xf32>, vector<128x384xf32>, vector<18x384xf32> -> vector<18x384xf32>
    %9 = vector.extract_strided_slice %8 {offsets = [0, 0], sizes = [16, 128], strides = [1, 1]} : vector<18x384xf32> to vector<16x128xf32>
    %10 = vector.extract_strided_slice %8 {offsets = [1, 128], sizes = [16, 128], strides = [1, 1]} : vector<18x384xf32> to vector<16x128xf32>
    %11 = arith.addf %9, %10 : vector<16x128xf32>
    %12 = vector.extract_strided_slice %8 {offsets = [2, 256], sizes = [16, 128], strides = [1, 1]} : vector<18x384xf32> to vector<16x128xf32>
    %13 = arith.addf %11, %12 : vector<16x128xf32>
    %c0_11 = arith.constant 0 : index
    %c0_12 = arith.constant 0 : index
    %14 = vector.load %arg3[%c0_11, %c0_12] : memref<1x128xf32, #tpu.memory_space<vmem>>, vector<1x128xf32>
    %15 = vector.broadcast %14 : vector<1x128xf32> to vector<16x128xf32>
    %16 = arith.addf %13, %15 : vector<16x128xf32>
    %cst_13 = arith.constant 0.000000e+00 : f32
    %17 = vector.broadcast %cst_13 : f32 to vector<16x128xf32>
    %18 = arith.maximumf %16, %17 : vector<16x128xf32>
    %c0_14 = arith.constant 0 : index
    %c0_15 = arith.constant 0 : index
    %19 = vector.load %arg8[%c0_14, %c0_15] : memref<18x128xf32, #tpu.memory_space<vmem>>, vector<1x128xf32>
    tpu.vector_store %arg8[%c0_14, %c0_15], %0 {strides = array<i32>} : memref<18x128xf32, #tpu.memory_space<vmem>>, vector<1x128xf32>,
    %c17_16 = arith.constant 17 : index
    %c0_17 = arith.constant 0 : index
    %20 = vector.load %arg8[%c17_16, %c0_17] : memref<18x128xf32, #tpu.memory_space<vmem>>, vector<1x128xf32>
    tpu.vector_store %arg8[%c17_16, %c0_17], %0 {strides = array<i32>} : memref<18x128xf32, #tpu.memory_space<vmem>>, vector<1x128xf32>,
    %c1_18 = arith.constant 1 : index
    %c0_19 = arith.constant 0 : index
    %21 = vector.load %arg8[%c1_18, %c0_19] : memref<18x128xf32, #tpu.memory_space<vmem>>, vector<16x128xf32>
    tpu.vector_store %arg8[%c1_18, %c0_19], %18 {strides = array<i32>} : memref<18x128xf32, #tpu.memory_space<vmem>>, vector<16x128xf32>,
    %c0_20 = arith.constant 0 : index
    %c0_21 = arith.constant 0 : index
    %22 = vector.load %arg8[%c0_20, %c0_21] : memref<18x128xf32, #tpu.memory_space<vmem>>, vector<18x128xf32>
    %c0_22 = arith.constant 0 : index
    %c0_23 = arith.constant 0 : index
    %23 = vector.load %arg4[%c0_22, %c0_23] : memref<128x384xf32, #tpu.memory_space<vmem>>, vector<128x384xf32>
    %cst_24 = arith.constant dense<0.000000e+00> : vector<18x384xf32>
    %24 = tpu.matmul %22, %23, %cst_24 {dimension_numbers = #tpu.dot_dimension_numbers<[1], [0], [0], [1], [0, 0, 1, 1], [], []>} : vector<18x128xf32>, vector<128x384xf32>, vector<18x384xf32> -> vector<18x384xf32>
    %25 = vector.extract_strided_slice %24 {offsets = [0, 0], sizes = [16, 128], strides = [1, 1]} : vector<18x384xf32> to vector<16x128xf32>
    %26 = vector.extract_strided_slice %24 {offsets = [1, 128], sizes = [16, 128], strides = [1, 1]} : vector<18x384xf32> to vector<16x128xf32>
    %27 = arith.addf %25, %26 : vector<16x128xf32>
    %28 = vector.extract_strided_slice %24 {offsets = [2, 256], sizes = [16, 128], strides = [1, 1]} : vector<18x384xf32> to vector<16x128xf32>
    %29 = arith.addf %27, %28 : vector<16x128xf32>
    %c0_25 = arith.constant 0 : index
    %c0_26 = arith.constant 0 : index
    %30 = vector.load %arg5[%c0_25, %c0_26] : memref<1x128xf32, #tpu.memory_space<vmem>>, vector<1x128xf32>
    %31 = vector.broadcast %30 : vector<1x128xf32> to vector<16x128xf32>
    %32 = arith.addf %29, %31 : vector<16x128xf32>
    %33 = arith.addf %32, %2 : vector<16x128xf32>
    %cst_27 = arith.constant 0.000000e+00 : f32
    %34 = vector.broadcast %cst_27 : f32 to vector<16x128xf32>
    %35 = arith.maximumf %33, %34 : vector<16x128xf32>
    %36 = vector.shape_cast %35 : vector<16x128xf32> to vector<1x16x128xf32>
    %c0_28 = arith.constant 0 : index
    %c0_29 = arith.constant 0 : index
    %c0_30 = arith.constant 0 : index
    %37 = vector.load %arg6[%c0_28, %c0_29, %c0_30] : memref<1x16x128xf32, #tpu.memory_space<vmem>>, vector<1x16x128xf32>
    tpu.vector_store %arg6[%c0_28, %c0_29, %c0_30], %36 {strides = array<i32>} : memref<1x16x128xf32, #tpu.memory_space<vmem>>, vector<1x16x128xf32>,
    return
  }
  func.func @transform_0(%arg0: i32) -> (i32, i32, i32) {
    %c0_i32 = arith.constant 0 : i32
    %c0_i32_0 = arith.constant 0 : i32
    %c0_i32_1 = arith.constant 0 : i32
    return %arg0, %c0_i32, %c0_i32_0 : i32, i32, i32
  }
  func.func @transform_1(%arg0: i32) -> (i32, i32) {
    %c0_i32 = arith.constant 0 : i32
    %c0_i32_0 = arith.constant 0 : i32
    %c0_i32_1 = arith.constant 0 : i32
    return %c0_i32, %c0_i32_0 : i32, i32
  }
  func.func @transform_2(%arg0: i32) -> (i32, i32) {
    %c0_i32 = arith.constant 0 : i32
    %c0_i32_0 = arith.constant 0 : i32
    %c0_i32_1 = arith.constant 0 : i32
    return %c0_i32, %c0_i32_0 : i32, i32
  }
  func.func @transform_3(%arg0: i32) -> (i32, i32) {
    %c0_i32 = arith.constant 0 : i32
    %c0_i32_0 = arith.constant 0 : i32
    %c0_i32_1 = arith.constant 0 : i32
    return %c0_i32, %c0_i32_0 : i32, i32
  }
  func.func @transform_4(%arg0: i32) -> (i32, i32) {
    %c0_i32 = arith.constant 0 : i32
    %c0_i32_0 = arith.constant 0 : i32
    %c0_i32_1 = arith.constant 0 : i32
    return %c0_i32, %c0_i32_0 : i32, i32
  }
  func.func @transform_5(%arg0: i32) -> (i32, i32, i32) {
    %c0_i32 = arith.constant 0 : i32
    %c0_i32_0 = arith.constant 0 : i32
    %c0_i32_1 = arith.constant 0 : i32
    return %arg0, %c0_i32, %c0_i32_0 : i32, i32, i32
  }
}

</mosaic_0001>

<llo_original>
// kernel: tpu_custom_call.1
$region0: #{tpu_custom_call.1}
  #allocation0 [shape = 'u32[]', space=smem, size = 0x4, offset = 0x4, fixed_abs, tag = 'smem constant byte address 0x4 - core index']
  #allocation1 [shape = 'u32[72,128]{1,0:T(1,128)}', space=vmem, size = 0x9000, scoped, tag = 'internal scratch']
  #allocation2 [shape = 'f32[18,128]{1,0:T(8,128)}', space=vmem, size = 0x3000, scoped, tag = 'scratch operand']
  #allocation3 [shape = 'f32[18,128]{1,0:T(8,128)}', space=vmem, size = 0x3000, scoped, tag = 'scratch operand']
  %s0 = inlined_call_operand.hbm [shape: f32[2,16,128], index: 0, kind: input, shape index: {}]
  %s1 = inlined_call_operand.hbm [shape: f32[128,384], index: 1, kind: input, shape index: {}]
  %s2 = inlined_call_operand.vmem [shape: f32[1,128], index: 2, kind: input, shape index: {}]
  %s3 = inlined_call_operand.hbm [shape: f32[128,384], index: 3, kind: input, shape index: {}]
  %s4 = inlined_call_operand.vmem [shape: f32[1,128], index: 4, kind: input, shape index: {}]
  %s5 = inlined_call_operand.hbm [shape: f32[2,16,128], index: 5, kind: output, shape index: {}]
  %s6 = sld [smem:[#allocation0]]
  $region65: #{tpu_custom_call.1} parent=0
    _
  %s8 = ssub.s32 1, %s6
  %s9 = scalar_select 0, %s8, %s6
  $region1: #{tpu_custom_call.1} parent=0
    #allocation4 [shape = 'u8[16384]{0}', space=vmem, size = 0x4000, scoped, tag = 'input window, operand 0']
    #allocation5 [shape = 's32[2]{0}', space=sflag, size = 0x8, scoped, tag = 'scoped memory for tpu_custom_call.1']
    #allocation6 [shape = 's32[2]{0}', space=sflag, size = 0x8, scoped, tag = 'scoped memory for tpu_custom_call.1']
    #allocation7 [shape = 'u8[196608]{0}', space=vmem, size = 0x30000, scoped, tag = 'input window, operand 1, single buffered']
    #allocation8 [shape = 's32[1]{0}', space=sflag, size = 0x4, scoped, tag = 'scoped memory for tpu_custom_call.1']
    #allocation9 [shape = 'u8[196608]{0}', space=vmem, size = 0x30000, scoped, tag = 'input window, operand 3, single buffered']
    #allocation10 [shape = 'u8[16384]{0}', space=vmem, size = 0x4000, scoped, tag = 'output window, operand 0']
    %10 = vsyncpa [#allocation5], 0
    %s11 = scalar_lea.sflag [#allocation5], 1
    %12 = vsyncpa %s11, 0
    %13 = vsyncpa [#allocation8], 0
    %14 = vsyncpa [#allocation6], 0
    %s15 = scalar_lea.sflag [#allocation6], 1
    %16 = vsyncpa %s15, 0
    loop: start=0, step=1, limit=4
    $region2: #{tpu_custom_call.1} parent=1 // loop_pre_header
      _
    $region3: #{tpu_custom_call.1} parent=1 // loop_header
      %s18 = sphi 0, %s22
      %p19 = scmp.ge.s32.totalorder %s18, 4
      %s28 = sphi 0, %s30
      %s31 = sphi 0, %s28
      %s32 = sphi 0, %s31
      %s48 = sphi 0, %s32
      %s52 = sphi 0, %s52
      %s54 = sphi 0, %s52
      %s55 = sphi 0, %s54
      %s69 = sphi 0, %s55
      %s73 = sphi 0, %s73
      %s75 = sphi 0, %s73
      %s76 = sphi 0, %s75
      %s90 = sphi 0, %s76
      %s94 = sphi 0, %s94
      %s96 = sphi 0, %s94
      %s97 = sphi 0, %s96
      %s111 = sphi 0, %s97
      %s115 = sphi 0, %s115
      %s117 = sphi 0, %s115
      %s118 = sphi 0, %s117
      %s132 = sphi 0, %s118
      %s138 = sphi 0, %s140
      %s141 = sphi 0, %s138
      %s142 = sphi 0, %s141
      %s158 = sphi 0, %s142
    $region4: #{tpu_custom_call.1} parent=1 // loop_header_branch
      %21 = sbr.rel (%p19) target = $region8
    $region5: #{tpu_custom_call.1} parent=1 // loop_body
      %s23 = ssub.s32 %s18, 1
      %s24 = ssub.s32 %s18, 2
      %s25 = sadd.s32 %s18, 1
      %s26 = ssub.s32 %s18, %s25
      %p27 = scmp.eq.s32.totalorder %s26, 0
      %s29 = sadd.s32 %s28, 1
      %s30 = scalar_select %p27, %s28, %s29
      %p33 = pneg %p27
      %p34 = scmp.eq.s32.totalorder %s18, 1
      %p35 = por %p33, %p34
      %p36 = scmp.ne.s32.totalorder %s28, %s31
      %p37 = scmp.eq.s32.totalorder %s18, 0
      %p38 = por %p36, %p37
      %p39 = scmp.ne.s32.totalorder %s28, %s31
      %p40 = scmp.eq.s32.totalorder %s23, 1
      %p41 = por %p39, %p40
      %p42 = scmp.ne.s32.totalorder %s31, %s32
      %p43 = scmp.eq.s32.totalorder %s23, 0
      %p44 = por %p42, %p43
      %p45 = scmp.ne.s32.totalorder %s31, %s32
      %p46 = scmp.eq.s32.totalorder %s24, 1
      %p47 = por %p45, %p46
      %p49 = scmp.ne.s32.totalorder %s32, %s48
      %p50 = scmp.eq.s32.totalorder %s24, 0
      %p51 = por %p49, %p50
      %s53 = sadd.s32 %s52, 1
      %p56 = scmp.eq.s32.totalorder %s18, 1
      %p57 = scmp.ne.s32.totalorder %s52, %s54
      %p58 = scmp.eq.s32.totalorder %s18, 0
      %p59 = por %p57, %p58
      %p60 = scmp.ne.s32.totalorder %s52, %s54
      %p61 = scmp.eq.s32.totalorder %s23, 1
      %p62 = por %p60, %p61
      %p63 = scmp.ne.s32.totalorder %s54, %s55
      %p64 = scmp.eq.s32.totalorder %s23, 0
      %p65 = por %p63, %p64
      %p66 = scmp.ne.s32.totalorder %s54, %s55
      %p67 = scmp.eq.s32.totalorder %s24, 1
      %p68 = por %p66, %p67
      %p70 = scmp.ne.s32.totalorder %s55, %s69
      %p71 = scmp.eq.s32.totalorder %s24, 0
      %p72 = por %p70, %p71
      %s74 = sadd.s32 %s73, 1
      %p77 = scmp.eq.s32.totalorder %s18, 1
      %p78 = scmp.ne.s32.totalorder %s73, %s75
      %p79 = scmp.eq.s32.totalorder %s18, 0
      %p80 = por %p78, %p79
      %p81 = scmp.ne.s32.totalorder %s73, %s75
      %p82 = scmp.eq.s32.totalorder %s23, 1
      %p83 = por %p81, %p82
      %p84 = scmp.ne.s32.totalorder %s75, %s76
      %p85 = scmp.eq.s32.totalorder %s23, 0
      %p86 = por %p84, %p85
      %p87 = scmp.ne.s32.totalorder %s75, %s76
      %p88 = scmp.eq.s32.totalorder %s24, 1
      %p89 = por %p87, %p88
      %p91 = scmp.ne.s32.totalorder %s76, %s90
      %p92 = scmp.eq.s32.totalorder %s24, 0
      %p93 = por %p91, %p92
      %s95 = sadd.s32 %s94, 1
      %p98 = scmp.eq.s32.totalorder %s18, 1
      %p99 = scmp.ne.s32.totalorder %s94, %s96
      %p100 = scmp.eq.s32.totalorder %s18, 0
      %p101 = por %p99, %p100
      %p102 = scmp.ne.s32.totalorder %s94, %s96
      %p103 = scmp.eq.s32.totalorder %s23, 1
      %p104 = por %p102, %p103
      %p105 = scmp.ne.s32.totalorder %s96, %s97
      %p106 = scmp.eq.s32.totalorder %s23, 0
      %p107 = por %p105, %p106
      %p108 = scmp.ne.s32.totalorder %s96, %s97
      %p109 = scmp.eq.s32.totalorder %s24, 1
      %p110 = por %p108, %p109
      %p112 = scmp.ne.s32.totalorder %s97, %s111
      %p113 = scmp.eq.s32.totalorder %s24, 0
      %p114 = por %p112, %p113
      %s116 = sadd.s32 %s115, 1
      %p119 = scmp.eq.s32.totalorder %s18, 1
      %p120 = scmp.ne.s32.totalorder %s115, %s117
      %p121 = scmp.eq.s32.totalorder %s18, 0
      %p122 = por %p120, %p121
      %p123 = scmp.ne.s32.totalorder %s115, %s117
      %p124 = scmp.eq.s32.totalorder %s23, 1
      %p125 = por %p123, %p124
      %p126 = scmp.ne.s32.totalorder %s117, %s118
      %p127 = scmp.eq.s32.totalorder %s23, 0
      %p128 = por %p126, %p127
      %p129 = scmp.ne.s32.totalorder %s117, %s118
      %p130 = scmp.eq.s32.totalorder %s24, 1
      %p131 = por %p129, %p130
      %p133 = scmp.ne.s32.totalorder %s118, %s132
      %p134 = scmp.eq.s32.totalorder %s24, 0
      %p135 = por %p133, %p134
      %s136 = ssub.s32 %s18, %s25
      %p137 = scmp.eq.s32.totalorder %s136, 0
      %s139 = sadd.s32 %s138, 1
      %s140 = scalar_select %p137, %s138, %s139
      %p143 = pneg %p137
      %p144 = scmp.eq.s32.totalorder %s18, 1
      %p145 = por %p143, %p144
      %p146 = scmp.ne.s32.totalorder %s138, %s141
      %p147 = scmp.eq.s32.totalorder %s18, 0
      %p148 = por %p146, %p147
      %p149 = scmp.ne.s32.totalorder %s138, %s141
      %p150 = scmp.eq.s32.totalorder %s23, 1
      %p151 = por %p149, %p150
      %p152 = scmp.ne.s32.totalorder %s141, %s142
      %p153 = scmp.eq.s32.totalorder %s23, 0
      %p154 = por %p152, %p153
      %p155 = scmp.ne.s32.totalorder %s141, %s142
      %p156 = scmp.eq.s32.totalorder %s24, 1
      %p157 = por %p155, %p156
      %p159 = scmp.ne.s32.totalorder %s142, %s158
      %p160 = scmp.eq.s32.totalorder %s24, 0
      %p161 = por %p159, %p160
      %p162 = scmp.le.s32.totalorder 1, %s18
      %p163 = scmp.lt.s32.totalorder %s18, 3
      %p164 = pnand %p162, %p163
      %p165 = pneg %p164
      // Predicated region
      $region9: #{tpu_custom_call.1} parent=5 // pred_check
        _
      $region10: #{tpu_custom_call.1} parent=5 // pred_check_branch
        %167 = sbr.rel (%p164) target = $region12
      $region11: #{tpu_custom_call.1} parent=5 // pred_region
        %s168 = ssub.s32 %s18, 1
        // Predicated region
        $region13: #{tpu_custom_call.1} parent=11 // pred_check
          %p169 = pneg %p65
        $region14: #{tpu_custom_call.1} parent=11 // pred_check_branch
          %171 = sbr.rel (%p169) target = $region16
        $region15: #{tpu_custom_call.1} parent=11 // pred_region
          %173 = vsyncadd [#allocation8], 0
          %s174 = sshll.u32 %s1, 4
          %s175 = int_to_ptr.hbm [resolvable:$true] %s174
          %s176 = sshll.u32 [#allocation7], 4
          %s177 = int_to_ptr.vmem [resolvable:$true] %s176
          %182 = dma.hbm_to_vmem [thread:$0]  %s175, 6144, %s177, [#allocation8], 384, 384, 24
        $region16: #{tpu_custom_call.1} parent=11 // pred_fallthru
          _
        // Predicated region
        $region17: #{tpu_custom_call.1} parent=11 // pred_check
          %p183 = pneg %p86
        $region18: #{tpu_custom_call.1} parent=11 // pred_check_branch
          %185 = sbr.rel (%p183) target = $region20
        $region19: #{tpu_custom_call.1} parent=11 // pred_region
          _
        $region20: #{tpu_custom_call.1} parent=11 // pred_fallthru
          _
        // Predicated region
        $region21: #{tpu_custom_call.1} parent=11 // pred_check
          %p186 = pneg %p107
        $region22: #{tpu_custom_call.1} parent=11 // pred_check_branch
          %188 = sbr.rel (%p186) target = $region24
        $region23: #{tpu_custom_call.1} parent=11 // pred_region
          %190 = vsyncadd [#allocation8], 0
          %s191 = sshll.u32 %s3, 4
          %s192 = int_to_ptr.hbm [resolvable:$true] %s191
          %s193 = sshll.u32 [#allocation9], 4
          %s194 = int_to_ptr.vmem [resolvable:$true] %s193
          %199 = dma.hbm_to_vmem [thread:$0]  %s192, 6144, %s194, [#allocation8], 384, 384, 24
        $region24: #{tpu_custom_call.1} parent=11 // pred_fallthru
          _
        // Predicated region
        $region25: #{tpu_custom_call.1} parent=11 // pred_check
          %p200 = pneg %p128
        $region26: #{tpu_custom_call.1} parent=11 // pred_check_branch
          %202 = sbr.rel (%p200) target = $region28
        $region27: #{tpu_custom_call.1} parent=11 // pred_region
          _
        $region28: #{tpu_custom_call.1} parent=11 // pred_fallthru
          _
      $region12: #{tpu_custom_call.1} parent=5 // pred_fallthru
        _
      %p203 = scmp.lt.s32.totalorder %s18, 2
      // Predicated region
      $region29: #{tpu_custom_call.1} parent=5 // pred_check
        %p204 = pneg %p203
      $region30: #{tpu_custom_call.1} parent=5 // pred_check_branch
        %206 = sbr.rel (%p204) target = $region32
      $region31: #{tpu_custom_call.1} parent=5 // pred_region
        // Predicated region
        $region33: #{tpu_custom_call.1} parent=31 // pred_check
          %p207 = pneg %p38
        $region34: #{tpu_custom_call.1} parent=31 // pred_check_branch
          %209 = sbr.rel (%p207) target = $region36
        $region35: #{tpu_custom_call.1} parent=31 // pred_region
          %s210 = sand.u32 %s28, 1
          %s211 = scalar_lea.sflag [#allocation5], %s210
          %s212 = sand.u32 %s28, 1
          %s213 = smul.addr %s212, 16
          %s214 = scalar_lea.vmem [#allocation4], %s213
          %216 = vsyncadd %s211, 0
          %s217 = smul.addr %s18, 2
          %s218 = smul.addr %s217, 8
          %s219 = scalar_lea.hbm %s0, %s218
          %s220 = sshll.u32 %s219, 4
          %s221 = int_to_ptr.hbm [resolvable:$true] %s220
          %s222 = sshll.u32 %s214, 4
          %s223 = int_to_ptr.vmem [resolvable:$true] %s222
          %228 = dma.hbm_to_vmem [thread:$0]  %s221, 256, %s223, %s211, 128, 128, 8
        $region36: #{tpu_custom_call.1} parent=31 // pred_fallthru
          _
      $region32: #{tpu_custom_call.1} parent=5 // pred_fallthru
        _
      %p229 = scmp.le.s32.totalorder 1, %s18
      %p230 = scmp.lt.s32.totalorder %s18, 3
      %p231 = pnand %p229, %p230
      %p232 = pneg %p231
      // Predicated region
      $region37: #{tpu_custom_call.1} parent=5 // pred_check
        _
      $region38: #{tpu_custom_call.1} parent=5 // pred_check_branch
        %234 = sbr.rel (%p231) target = $region40
      $region39: #{tpu_custom_call.1} parent=5 // pred_region
        %s235 = ssub.s32 %s18, 1
        %s236 = sand.u32 %s31, 1
        %s237 = scalar_lea.sflag [#allocation5], %s236
        %s238 = sand.u32 %s31, 1
        %s239 = smul.addr %s238, 16
        %s240 = scalar_lea.vmem [#allocation4], %s239
        // Predicated region
        $region41: #{tpu_custom_call.1} parent=39 // pred_check
          %p241 = pneg %p44
        $region42: #{tpu_custom_call.1} parent=39 // pred_check_branch
          %243 = sbr.rel (%p241) target = $region44
        $region43: #{tpu_custom_call.1} parent=39 // pred_region
          %245 = dma.done %s237, 256
        $region44: #{tpu_custom_call.1} parent=39 // pred_fallthru
          _
        // Predicated region
        $region45: #{tpu_custom_call.1} parent=39 // pred_check
          %p246 = pneg %p65
        $region46: #{tpu_custom_call.1} parent=39 // pred_check_branch
          %248 = sbr.rel (%p246) target = $region48
        $region47: #{tpu_custom_call.1} parent=39 // pred_region
          %250 = dma.done [#allocation8], 6144
        $region48: #{tpu_custom_call.1} parent=39 // pred_fallthru
          _
        // Predicated region
        $region49: #{tpu_custom_call.1} parent=39 // pred_check
          %p251 = pneg %p107
        $region50: #{tpu_custom_call.1} parent=39 // pred_check_branch
          %253 = sbr.rel (%p251) target = $region52
        $region51: #{tpu_custom_call.1} parent=39 // pred_region
          %255 = dma.done [#allocation8], 6144
        $region52: #{tpu_custom_call.1} parent=39 // pred_fallthru
          _
        %s256 = sand.u32 %s31, 1
        %s257 = scalar_lea.sflag [#allocation5], %s256
        %s258 = sand.u32 %s31, 1
        %s259 = smul.addr %s258, 16
        %s260 = scalar_lea.vmem [#allocation4], %s259
        %p261 = pneg %p44
        %p262 = pneg %p41
        %p263 = pneg %p65
        %p264 = pneg %p62
        %p265 = pneg %p86
        %p266 = pneg %p83
        %p267 = pneg %p107
        %p268 = pneg %p104
        %p269 = pneg %p128
        %p270 = pneg %p125
        %p271 = pneg %p154
        %p272 = pneg %p151
        %s273 = sand.u32 %s141, 1
        %s274 = scalar_lea.sflag [#allocation6], %s273
        %s275 = sand.u32 %s141, 1
        %s276 = smul.addr %s275, 16
        %s277 = scalar_lea.vmem [#allocation10], %s276
        %v278 = vld [vmem:[%s240] sm:$0xff]
        %v279 = vld [vmem:[%s240 + $0x8] sm:$0xff]
        %280 = vst [vmem:[#allocation2] sm:$0x1] 0.0
        %281 = vst [vmem:[#allocation2 + $0x11] sm:$0x1] 0.0
        %282 = vst [vmem:[#allocation2 + $0x1] sm:$0xff] %v278
        %283 = vst [vmem:[#allocation2 + $0x9] sm:$0xff] %v279
        %v284 = vld [vmem:[#allocation2] sm:$0xff]
        %v285 = vld [vmem:[#allocation2 + $0x8] sm:$0xff]
        %v286 = vld [vmem:[#allocation2 + $0x10] sm:$0x3]
        %v287 = vld [vmem:[#allocation7] sm:$0xff]
        %v288 = vld [vmem:[#allocation7 + $0x8] sm:$0xff]
        %v289 = vld [vmem:[#allocation7 + $0x10] sm:$0xff]
        %v290 = vld [vmem:[#allocation7 + $0x18] sm:$0xff]
        %v291 = vld [vmem:[#allocation7 + $0x20] sm:$0xff]
        %v292 = vld [vmem:[#allocation7 + $0x28] sm:$0xff]
        %v293 = vld [vmem:[#allocation7 + $0x30] sm:$0xff]
        %v294 = vld [vmem:[#allocation7 + $0x38] sm:$0xff]
        %v295 = vld [vmem:[#allocation7 + $0x40] sm:$0xff]
        %v296 = vld [vmem:[#allocation7 + $0x48] sm:$0xff]
        %v297 = vld [vmem:[#allocation7 + $0x50] sm:$0xff]
        %v298 = vld [vmem:[#allocation7 + $0x58] sm:$0xff]
        %v299 = vld [vmem:[#allocation7 + $0x60] sm:$0xff]
        %v300 = vld [vmem:[#allocation7 + $0x68] sm:$0xff]
        %v301 = vld [vmem:[#allocation7 + $0x70] sm:$0xff]
        %v302 = vld [vmem:[#allocation7 + $0x78] sm:$0xff]
        %v303 = vld [vmem:[#allocation7 + $0x80] sm:$0xff]
        %v304 = vld [vmem:[#allocation7 + $0x88] sm:$0xff]
        %v305 = vld [vmem:[#allocation7 + $0x90] sm:$0xff]
        %v306 = vld [vmem:[#allocation7 + $0x98] sm:$0xff]
        %v307 = vld [vmem:[#allocation7 + $0xa0] sm:$0xff]
        %v308 = vld [vmem:[#allocation7 + $0xa8] sm:$0xff]
        %v309 = vld [vmem:[#allocation7 + $0xb0] sm:$0xff]
        %v310 = vld [vmem:[#allocation7 + $0xb8] sm:$0xff]
        %v311 = vld [vmem:[#allocation7 + $0xc0] sm:$0xff]
        %v312 = vld [vmem:[#allocation7 + $0xc8] sm:$0xff]
        %v313 = vld [vmem:[#allocation7 + $0xd0] sm:$0xff]
        %v314 = vld [vmem:[#allocation7 + $0xd8] sm:$0xff]
        %v315 = vld [vmem:[#allocation7 + $0xe0] sm:$0xff]
        %v316 = vld [vmem:[#allocation7 + $0xe8] sm:$0xff]
        %v317 = vld [vmem:[#allocation7 + $0xf0] sm:$0xff]
        %v318 = vld [vmem:[#allocation7 + $0xf8] sm:$0xff]
        %v319 = vld [vmem:[#allocation7 + $0x100] sm:$0xff]
        %v320 = vld [vmem:[#allocation7 + $0x108] sm:$0xff]
        %v321 = vld [vmem:[#allocation7 + $0x110] sm:$0xff]
        %v322 = vld [vmem:[#allocation7 + $0x118] sm:$0xff]
        %v323 = vld [vmem:[#allocation7 + $0x120] sm:$0xff]
        %v324 = vld [vmem:[#allocation7 + $0x128] sm:$0xff]
        %v325 = vld [vmem:[#allocation7 + $0x130] sm:$0xff]
        %v326 = vld [vmem:[#allocation7 + $0x138] sm:$0xff]
        %v327 = vld [vmem:[#allocation7 + $0x140] sm:$0xff]
        %v328 = vld [vmem:[#allocation7 + $0x148] sm:$0xff]
        %v329 = vld [vmem:[#allocation7 + $0x150] sm:$0xff]
        %v330 = vld [vmem:[#allocation7 + $0x158] sm:$0xff]
        %v331 = vld [vmem:[#allocation7 + $0x160] sm:$0xff]
        %v332 = vld [vmem:[#allocation7 + $0x168] sm:$0xff]
        %v333 = vld [vmem:[#allocation7 + $0x170] sm:$0xff]
        %v334 = vld [vmem:[#allocation7 + $0x178] sm:$0xff]
        %335 = vmatpush.msra.mxu0 %v332
        %336 = vmatpush.msra.mxu0 %v329
        %337 = vmatpush.msra.mxu0 %v326
        %338 = vmatpush.msra.mxu0 %v323
        %339 = vmatpush.msra.mxu0 %v320
        %340 = vmatpush.msra.mxu0 %v317
        %341 = vmatpush.msra.mxu0 %v314
        %342 = vmatpush.msra.mxu0 %v311
        %343 = vmatpush.msra.mxu0 %v308
        %344 = vmatpush.msra.mxu0 %v305
        %345 = vmatpush.msra.mxu0 %v302
        %346 = vmatpush.msra.mxu0 %v299
        %347 = vmatpush.msra.mxu0 %v296
        %348 = vmatpush.msra.mxu0 %v293
        %349 = vmatpush.msra.mxu0 %v290
        %350 = vmatpush.msra.mxu0 %v287
        %351 = vmatmul.f32.gmra.mxu0 %v284
        %v352 = vpop.f32.mrf.mxu0
        %v353 = vadd.f32 0.0, %v352
        %354 = vmatmul.f32.gmra.mxu0 %v285
        %v355 = vpop.f32.mrf.mxu0
        %v356 = vadd.f32 0.0, %v355
        %357 = vmatmul.f32.gmra.mxu0 %v286
        %v358 = vpop.f32.mrf.mxu0
        %359 = vdwg.mxu0
        %360 = vmatpush.msra.mxu0 %v333
        %361 = vmatpush.msra.mxu0 %v330
        %362 = vmatpush.msra.mxu0 %v327
        %363 = vmatpush.msra.mxu0 %v324
        %364 = vmatpush.msra.mxu0 %v321
        %365 = vmatpush.msra.mxu0 %v318
        %366 = vmatpush.msra.mxu0 %v315
        %367 = vmatpush.msra.mxu0 %v312
        %368 = vmatpush.msra.mxu0 %v309
        %369 = vmatpush.msra.mxu0 %v306
        %370 = vmatpush.msra.mxu0 %v303
        %371 = vmatpush.msra.mxu0 %v300
        %372 = vmatpush.msra.mxu0 %v297
        %373 = vmatpush.msra.mxu0 %v294
        %374 = vmatpush.msra.mxu0 %v291
        %375 = vmatpush.msra.mxu0 %v288
        %376 = vmatmul.f32.gmra.mxu0 %v284
        %v377 = vpop.f32.mrf.mxu0
        %v378 = vadd.f32 0.0, %v377
        %379 = vmatmul.f32.gmra.mxu0 %v285
        %v380 = vpop.f32.mrf.mxu0
        %v381 = vadd.f32 0.0, %v380
        %382 = vmatmul.f32.gmra.mxu0 %v286
        %v383 = vpop.f32.mrf.mxu0
        %v384 = vadd.f32 0.0, %v383
        %385 = vdwg.mxu0
        %386 = vmatpush.msra.mxu0 %v334
        %387 = vmatpush.msra.mxu0 %v331
        %388 = vmatpush.msra.mxu0 %v328
        %389 = vmatpush.msra.mxu0 %v325
        %390 = vmatpush.msra.mxu0 %v322
        %391 = vmatpush.msra.mxu0 %v319
        %392 = vmatpush.msra.mxu0 %v316
        %393 = vmatpush.msra.mxu0 %v313
        %394 = vmatpush.msra.mxu0 %v310
        %395 = vmatpush.msra.mxu0 %v307
        %396 = vmatpush.msra.mxu0 %v304
        %397 = vmatpush.msra.mxu0 %v301
        %398 = vmatpush.msra.mxu0 %v298
        %399 = vmatpush.msra.mxu0 %v295
        %400 = vmatpush.msra.mxu0 %v292
        %401 = vmatpush.msra.mxu0 %v289
        %402 = vmatmul.f32.gmra.mxu0 %v284
        %v403 = vpop.f32.mrf.mxu0
        %v404 = vadd.f32 0.0, %v403
        %405 = vmatmul.f32.gmra.mxu0 %v285
        %v406 = vpop.f32.mrf.mxu0
        %v407 = vadd.f32 0.0, %v406
        %408 = vmatmul.f32.gmra.mxu0 %v286
        %v409 = vpop.f32.mrf.mxu0
        %v410 = vadd.f32 0.0, %v409
        %411 = vdwg.mxu0
        %vm415 = vcmask 1046528
        %v416 = vrot.slane %v378, 1
        %v417 = vrot.slane %v381, 1
        %v418 = vsel %vm415, %v416, %v417
        %v419 = vrot.slane %v384, 1
        %v420 = vsel %vm415, %v417, %v419
        %v423 = vadd.f32 %v353, %v418
        %v424 = vadd.f32 %v356, %v420
        %vm428 = vcmask 1045504
        %v429 = vrot.slane %v404, 2
        %v430 = vrot.slane %v407, 2
        %v431 = vsel %vm428, %v429, %v430
        %v432 = vrot.slane %v410, 2
        %v433 = vsel %vm428, %v430, %v432
        %v436 = vadd.f32 %v423, %v431
        %v437 = vadd.f32 %v424, %v433
        %v438 = vld [vmem:[%s2] sm:$0x1]
        %v440 = vperm.slane %v438, 0
        %v442 = vadd.f32 %v436, %v440
        %v443 = vadd.f32 %v437, %v440
        %v444 = vmax.f32 %v442, 0.0
        %v445 = vmax.f32 %v443, 0.0
        %446 = vst [vmem:[#allocation3] sm:$0x1] 0.0
        %447 = vst [vmem:[#allocation3 + $0x11] sm:$0x1] 0.0
        %448 = vst [vmem:[#allocation3 + $0x1] sm:$0xff] %v444
        %449 = vst [vmem:[#allocation3 + $0x9] sm:$0xff] %v445
        %v450 = vld [vmem:[#allocation3] sm:$0xff]
        %v451 = vld [vmem:[#allocation3 + $0x8] sm:$0xff]
        %v452 = vld [vmem:[#allocation3 + $0x10] sm:$0x3]
        %v453 = vld [vmem:[#allocation9] sm:$0xff]
        %v454 = vld [vmem:[#allocation9 + $0x8] sm:$0xff]
        %v455 = vld [vmem:[#allocation9 + $0x10] sm:$0xff]
        %v456 = vld [vmem:[#allocation9 + $0x18] sm:$0xff]
        %v457 = vld [vmem:[#allocation9 + $0x20] sm:$0xff]
        %v458 = vld [vmem:[#allocation9 + $0x28] sm:$0xff]
        %v459 = vld [vmem:[#allocation9 + $0x30] sm:$0xff]
        %v460 = vld [vmem:[#allocation9 + $0x38] sm:$0xff]
        %v461 = vld [vmem:[#allocation9 + $0x40] sm:$0xff]
        %v462 = vld [vmem:[#allocation9 + $0x48] sm:$0xff]
        %v463 = vld [vmem:[#allocation9 + $0x50] sm:$0xff]
        %v464 = vld [vmem:[#allocation9 + $0x58] sm:$0xff]
        %v465 = vld [vmem:[#allocation9 + $0x60] sm:$0xff]
        %v466 = vld [vmem:[#allocation9 + $0x68] sm:$0xff]
        %v467 = vld [vmem:[#allocation9 + $0x70] sm:$0xff]
        %v468 = vld [vmem:[#allocation9 + $0x78] sm:$0xff]
        %v469 = vld [vmem:[#allocation9 + $0x80] sm:$0xff]
        %v470 = vld [vmem:[#allocation9 + $0x88] sm:$0xff]
        %v471 = vld [vmem:[#allocation9 + $0x90] sm:$0xff]
        %v472 = vld [vmem:[#allocation9 + $0x98] sm:$0xff]
        %v473 = vld [vmem:[#allocation9 + $0xa0] sm:$0xff]
        %v474 = vld [vmem:[#allocation9 + $0xa8] sm:$0xff]
        %v475 = vld [vmem:[#allocation9 + $0xb0] sm:$0xff]
        %v476 = vld [vmem:[#allocation9 + $0xb8] sm:$0xff]
        %v477 = vld [vmem:[#allocation9 + $0xc0] sm:$0xff]
        %v478 = vld [vmem:[#allocation9 + $0xc8] sm:$0xff]
        %v479 = vld [vmem:[#allocation9 + $0xd0] sm:$0xff]
        %v480 = vld [vmem:[#allocation9 + $0xd8] sm:$0xff]
        %v481 = vld [vmem:[#allocation9 + $0xe0] sm:$0xff]
        %v482 = vld [vmem:[#allocation9 + $0xe8] sm:$0xff]
        %v483 = vld [vmem:[#allocation9 + $0xf0] sm:$0xff]
        %v484 = vld [vmem:[#allocation9 + $0xf8] sm:$0xff]
        %v485 = vld [vmem:[#allocation9 + $0x100] sm:$0xff]
        %v486 = vld [vmem:[#allocation9 + $0x108] sm:$0xff]
        %v487 = vld [vmem:[#allocation9 + $0x110] sm:$0xff]
        %v488 = vld [vmem:[#allocation9 + $0x118] sm:$0xff]
        %v489 = vld [vmem:[#allocation9 + $0x120] sm:$0xff]
        %v490 = vld [vmem:[#allocation9 + $0x128] sm:$0xff]
        %v491 = vld [vmem:[#allocation9 + $0x130] sm:$0xff]
        %v492 = vld [vmem:[#allocation9 + $0x138] sm:$0xff]
        %v493 = vld [vmem:[#allocation9 + $0x140] sm:$0xff]
        %v494 = vld [vmem:[#allocation9 + $0x148] sm:$0xff]
        %v495 = vld [vmem:[#allocation9 + $0x150] sm:$0xff]
        %v496 = vld [vmem:[#allocation9 + $0x158] sm:$0xff]
        %v497 = vld [vmem:[#allocation9 + $0x160] sm:$0xff]
        %v498 = vld [vmem:[#allocation9 + $0x168] sm:$0xff]
        %v499 = vld [vmem:[#allocation9 + $0x170] sm:$0xff]
        %v500 = vld [vmem:[#allocation9 + $0x178] sm:$0xff]
        %501 = vmatpush.msra.mxu0 %v498
        %502 = vmatpush.msra.mxu0 %v495
        %503 = vmatpush.msra.mxu0 %v492
        %504 = vmatpush.msra.mxu0 %v489
        %505 = vmatpush.msra.mxu0 %v486
        %506 = vmatpush.msra.mxu0 %v483
        %507 = vmatpush.msra.mxu0 %v480
        %508 = vmatpush.msra.mxu0 %v477
        %509 = vmatpush.msra.mxu0 %v474
        %510 = vmatpush.msra.mxu0 %v471
        %511 = vmatpush.msra.mxu0 %v468
        %512 = vmatpush.msra.mxu0 %v465
        %513 = vmatpush.msra.mxu0 %v462
        %514 = vmatpush.msra.mxu0 %v459
        %515 = vmatpush.msra.mxu0 %v456
        %516 = vmatpush.msra.mxu0 %v453
        %517 = vmatmul.f32.gmra.mxu0 %v450
        %v518 = vpop.f32.mrf.mxu0
        %v519 = vadd.f32 0.0, %v518
        %520 = vmatmul.f32.gmra.mxu0 %v451
        %v521 = vpop.f32.mrf.mxu0
        %v522 = vadd.f32 0.0, %v521
        %523 = vmatmul.f32.gmra.mxu0 %v452
        %v524 = vpop.f32.mrf.mxu0
        %525 = vdwg.mxu0
        %526 = vmatpush.msra.mxu0 %v499
        %527 = vmatpush.msra.mxu0 %v496
        %528 = vmatpush.msra.mxu0 %v493
        %529 = vmatpush.msra.mxu0 %v490
        %530 = vmatpush.msra.mxu0 %v487
        %531 = vmatpush.msra.mxu0 %v484
        %532 = vmatpush.msra.mxu0 %v481
        %533 = vmatpush.msra.mxu0 %v478
        %534 = vmatpush.msra.mxu0 %v475
        %535 = vmatpush.msra.mxu0 %v472
        %536 = vmatpush.msra.mxu0 %v469
        %537 = vmatpush.msra.mxu0 %v466
        %538 = vmatpush.msra.mxu0 %v463
        %539 = vmatpush.msra.mxu0 %v460
        %540 = vmatpush.msra.mxu0 %v457
        %541 = vmatpush.msra.mxu0 %v454
        %542 = vmatmul.f32.gmra.mxu0 %v450
        %v543 = vpop.f32.mrf.mxu0
        %v544 = vadd.f32 0.0, %v543
        %545 = vmatmul.f32.gmra.mxu0 %v451
        %v546 = vpop.f32.mrf.mxu0
        %v547 = vadd.f32 0.0, %v546
        %548 = vmatmul.f32.gmra.mxu0 %v452
        %v549 = vpop.f32.mrf.mxu0
        %v550 = vadd.f32 0.0, %v549
        %551 = vdwg.mxu0
        %552 = vmatpush.msra.mxu0 %v500
        %553 = vmatpush.msra.mxu0 %v497
        %554 = vmatpush.msra.mxu0 %v494
        %555 = vmatpush.msra.mxu0 %v491
        %556 = vmatpush.msra.mxu0 %v488
        %557 = vmatpush.msra.mxu0 %v485
        %558 = vmatpush.msra.mxu0 %v482
        %559 = vmatpush.msra.mxu0 %v479
        %560 = vmatpush.msra.mxu0 %v476
        %561 = vmatpush.msra.mxu0 %v473
        %562 = vmatpush.msra.mxu0 %v470
        %563 = vmatpush.msra.mxu0 %v467
        %564 = vmatpush.msra.mxu0 %v464
        %565 = vmatpush.msra.mxu0 %v461
        %566 = vmatpush.msra.mxu0 %v458
        %567 = vmatpush.msra.mxu0 %v455
        %568 = vmatmul.f32.gmra.mxu0 %v450
        %v569 = vpop.f32.mrf.mxu0
        %v570 = vadd.f32 0.0, %v569
        %571 = vmatmul.f32.gmra.mxu0 %v451
        %v572 = vpop.f32.mrf.mxu0
        %v573 = vadd.f32 0.0, %v572
        %574 = vmatmul.f32.gmra.mxu0 %v452
        %v575 = vpop.f32.mrf.mxu0
        %v576 = vadd.f32 0.0, %v575
        %577 = vdwg.mxu0
        %v581 = vrot.slane %v544, 1
        %v582 = vrot.slane %v547, 1
        %v583 = vsel %vm415, %v581, %v582
        %v584 = vrot.slane %v550, 1
        %v585 = vsel %vm415, %v582, %v584
        %v588 = vadd.f32 %v519, %v583
        %v589 = vadd.f32 %v522, %v585
        %v593 = vrot.slane %v570, 2
        %v594 = vrot.slane %v573, 2
        %v595 = vsel %vm428, %v593, %v594
        %v596 = vrot.slane %v576, 2
        %v597 = vsel %vm428, %v594, %v596
        %v600 = vadd.f32 %v588, %v595
        %v601 = vadd.f32 %v589, %v597
        %v602 = vld [vmem:[%s4] sm:$0x1]
        %v604 = vperm.slane %v602, 0
        %v606 = vadd.f32 %v600, %v604
        %v607 = vadd.f32 %v601, %v604
        %v608 = vadd.f32 %v606, %v278
        %v609 = vadd.f32 %v607, %v279
        %v610 = vmax.f32 %v608, 0.0
        %v611 = vmax.f32 %v609, 0.0
        %612 = vst [vmem:[%s277] sm:$0xff] %v610
        %613 = vst [vmem:[%s277 + $0x8] sm:$0xff] %v611
        %s614 = sand.u32 %s141, 1
        %s615 = scalar_lea.sflag [#allocation6], %s614
        %s616 = sand.u32 %s141, 1
        %s617 = smul.addr %s616, 16
        %s618 = scalar_lea.vmem [#allocation10], %s617
        // Predicated region
        $region53: #{tpu_custom_call.1} parent=39 // pred_check
          %p619 = pneg %p151
        $region54: #{tpu_custom_call.1} parent=39 // pred_check_branch
          %621 = sbr.rel (%p619) target = $region56
        $region55: #{tpu_custom_call.1} parent=39 // pred_region
          %623 = vsyncadd %s615, 0
          %s624 = smul.addr %s23, 2
          %s625 = smul.addr %s624, 8
          %s626 = scalar_lea.hbm %s5, %s625
          %s627 = sshll.u32 %s618, 4
          %s628 = int_to_ptr.vmem [resolvable:$true] %s627
          %s629 = sshll.u32 %s626, 4
          %s630 = int_to_ptr.hbm [resolvable:$true] %s629
          %635 = dma.vmem_to_hbm [thread:$0]  %s628, 256, %s630, %s615, 128, 128, 8
        $region56: #{tpu_custom_call.1} parent=39 // pred_fallthru
          _
      $region40: #{tpu_custom_call.1} parent=5 // pred_fallthru
        _
      %p636 = scmp.le.s32.totalorder 2, %s18
      // Predicated region
      $region57: #{tpu_custom_call.1} parent=5 // pred_check
        %p637 = pneg %p636
      $region58: #{tpu_custom_call.1} parent=5 // pred_check_branch
        %639 = sbr.rel (%p637) target = $region60
      $region59: #{tpu_custom_call.1} parent=5 // pred_region
        %s640 = ssub.s32 %s18, 2
        // Predicated region
        $region61: #{tpu_custom_call.1} parent=59 // pred_check
          %p641 = pneg %p157
        $region62: #{tpu_custom_call.1} parent=59 // pred_check_branch
          %643 = sbr.rel (%p641) target = $region64
        $region63: #{tpu_custom_call.1} parent=59 // pred_region
          %s644 = sand.u32 %s142, 1
          %s645 = scalar_lea.sflag [#allocation6], %s644
          %s646 = sand.u32 %s142, 1
          %s647 = smul.addr %s646, 16
          %s648 = scalar_lea.vmem [#allocation10], %s647
          %650 = dma.done %s645, 256
        $region64: #{tpu_custom_call.1} parent=59 // pred_fallthru
          _
      $region60: #{tpu_custom_call.1} parent=5 // pred_fallthru
        _
    $region6: #{tpu_custom_call.1} parent=1 // loop_footer
      %s22 = sadd.s32 1, %s18
    $region7: #{tpu_custom_call.1} parent=1 // loop_footer_branch
      %17 = sbr.rel target = $region3
    $region8: #{tpu_custom_call.1} parent=1 // loop_exit
      _
    %651 = vsyncpa [#allocation5], 1
    %s652 = scalar_lea.sflag [#allocation5], 1
    %653 = vsyncpa %s652, 1
    %654 = vsyncpa [#allocation8], 1
    %655 = vsyncpa [#allocation6], 1
    %s656 = scalar_lea.sflag [#allocation6], 1
    %657 = vsyncpa %s656, 1

</llo_original>
